<compile_context>
chip_gen: v6e
topology: v6e:2x2x1
jax: 0.10.0
libtpu: 0.0.40
codegen_flags: <defaults>
</compile_context>

<pallas_src>
import functools

import jax
import jax.numpy as jnp
import numpy as np
from jax.experimental import pallas as pl
from jax.experimental.pallas import tpu as pltpu


# ---------------------------------------------------------------------------
# Kernel
# ---------------------------------------------------------------------------
def _pixel_shuffle_kernel(x_ref, q_ref, p_ref, o_ref, xs_ref, m_ref,
                          *, ry, rx, cblk, hblk, width):
    """One grid step = one batch element x cblk output channels x one H block.

    x_ref : (cblk*ry*rx, hblk, W)   input channels for this block
    q_ref : (hblk*ry, ry*hblk)      row  (sublane) interleave permutation
    p_ref : (rx*W,    W*rx)         col  (lane)    interleave permutation
    o_ref : (cblk, hblk*ry, W*rx)   output tile
    xs_ref: (ry*hblk, rx*W)         per-channel staging scratch (block layout)
    m_ref : (ry*hblk, W*rx)         column-interleaved intermediate scratch
    """

    def one_channel(cc):
        base = cc * (ry * rx)
        # Stage the ry*rx sub-pixel planes of this output channel as a
        # (ry, rx) grid of (hblk, W) blocks:
        #   xs[i*hblk + h, j*W + w] = x[base + i*rx + j, h, w]
        for i in range(ry):
            for j in range(rx):
                xs_ref[i * hblk:(i + 1) * hblk, j * width:(j + 1) * width] = (
                    x_ref[base + i * rx + j].astype(xs_ref.dtype))
        # Lane interleave with one MXU matmul against a 0/1 permutation matrix.
        m_ref[...] = jnp.dot(
            xs_ref[...], p_ref[...],
            preferred_element_type=jnp.float32).astype(m_ref.dtype)
        # Sublane interleave with one MXU matmul; result goes straight to the
        # output tile (no accumulator carried across loop iterations).
        o_ref[cc] = jnp.dot(
            q_ref[...], m_ref[...],
            preferred_element_type=jnp.float32).astype(o_ref.dtype)

    if cblk <= 8:
        # Small channel block: full unroll gives the scheduler visibility.
        for cc in range(cblk):
            one_channel(cc)
    else:
        # Large channel block: keep IR size and live ranges bounded.
        @pl.loop(0, cblk)
        def _(cc):
            one_channel(cc)


# ---------------------------------------------------------------------------
# Constant permutation matrices
# ---------------------------------------------------------------------------
def _row_perm_matrix(ry, hblk, dtype):
    """q[h*ry + i, i*hblk + h] = 1  (local to one H block)."""
    q = np.zeros((hblk * ry, ry * hblk), np.float32)
    h = np.arange(hblk)
    for i in range(ry):
        q[h * ry + i, i * hblk + h] = 1.0
    return jnp.asarray(q, dtype=dtype)


def _col_perm_matrix(rx, w, dtype):
    """p[j*w + v, v*rx + j] = 1."""
    p = np.zeros((rx * w, w * rx), np.float32)
    v = np.arange(w)
    for j in range(rx):
        p[j * w + v, v * rx + j] = 1.0
    return jnp.asarray(p, dtype=dtype)


# ---------------------------------------------------------------------------
# Tile-size selection
# ---------------------------------------------------------------------------
def _largest_divisor_leq(n, cap):
    cap = max(1, min(n, cap))
    for d in range(cap, 0, -1):
        if n % d == 0:
            return d
    return 1


def _choose_tiling(B, C_out, H, W, ry, rx, itemsize,
                   budget_bytes=6 << 20, max_hblk=256):
    """Pick (cblk, hblk) so one grid step's (input + output) bytes fit the budget."""
    row_bytes = 2 * ry * rx * W * itemsize  # in + out bytes per input row per channel

    # H block: divisor of H that is either H itself or a multiple of 8
    # (TPU sublane tiling rule for non-full second-to-last block dims).
    h_divs = [d for d in range(1, H + 1) if H % d == 0 and (d == H or d % 8 == 0)]
    fitting = [d for d in h_divs if d * row_bytes <= budget_bytes and d <= max_hblk]
    if fitting:
        hblk = max(fitting)
    else:
        fitting = [d for d in h_divs if d * row_bytes <= budget_bytes]
        hblk = max(fitting) if fitting else min(h_divs)

    per_chan = hblk * row_bytes
    cblk = _largest_divisor_leq(C_out, max(1, budget_bytes // per_chan))

    # v7x has 2 TensorCores: try to provide at least 2 grid steps to shard.
    if B * (C_out // cblk) * (H // hblk) < 2 and C_out > 1:
        cblk = _largest_divisor_leq(C_out, max(1, (C_out + 1) // 2))
    return cblk, hblk


# ---------------------------------------------------------------------------
# Wrapper
# ---------------------------------------------------------------------------
def pixel_shuffle(x, ry=2, rx=2):
    B, C, H, W = x.shape
    if C % (ry * rx) != 0:
        raise ValueError(f"C={C} must be divisible by ry*rx={ry * rx}")
    C_out = C // (ry * rx)
    Hry, Wrx = H * ry, W * rx
    itemsize = jnp.dtype(x.dtype).itemsize

    # 0/1 values (and copied bf16 inputs) are exact in bf16; use f32 otherwise.
    cdt = jnp.bfloat16 if x.dtype == jnp.bfloat16 else jnp.float32
    cdt_size = jnp.dtype(cdt).itemsize

    cblk, hblk = _choose_tiling(B, C_out, H, W, ry, rx, itemsize)
    n_c = C_out // cblk
    n_h = H // hblk

    q = _row_perm_matrix(ry, hblk, cdt)   # (hblk*ry, ry*hblk), constant in VMEM
    p = _col_perm_matrix(rx, W, cdt)      # (rx*W,    W*rx),    constant in VMEM

    kernel = functools.partial(_pixel_shuffle_kernel, ry=ry, rx=rx,
                               cblk=cblk, hblk=hblk, width=W)

    # VMEM accounting: double-buffered in/out tiles + constants + scratch.
    tile_bytes = 2 * cblk * ry * rx * hblk * W * itemsize       # in + out per step
    const_bytes = int((q.size + p.size)) * cdt_size
    scratch_bytes = (ry * hblk * rx * W + ry * hblk * Wrx) * cdt_size
    need = 2 * tile_bytes + 2 * const_bytes + scratch_bytes
    vmem_limit = int(min(max(need * 3 // 2 + (2 << 20), 16 << 20), 48 << 20))

    flops = 2 * B * C_out * n_h * (
        (ry * hblk) * (rx * W) * Wrx + (hblk * ry) * (ry * hblk) * Wrx)
    bytes_accessed = 2 * int(x.size) * itemsize + const_bytes

    grid = (B, n_c, n_h)
    return pl.pallas_call(
        kernel,
        out_shape=jax.ShapeDtypeStruct((B, C_out, Hry, Wrx), x.dtype),
        grid=grid,
        in_specs=[
            # input channels for output-channel block c are exactly block c of
            # size cblk*ry*rx along the C axis; H block hb maps 1:1.
            pl.BlockSpec((pl.Squeezed(), cblk * ry * rx, hblk, W),
                         lambda b, c, hb: (b, c, hb, 0)),
            pl.BlockSpec((hblk * ry, ry * hblk), lambda b, c, hb: (0, 0)),
            pl.BlockSpec((rx * W, Wrx), lambda b, c, hb: (0, 0)),
        ],
        out_specs=pl.BlockSpec((pl.Squeezed(), cblk, hblk * ry, Wrx),
                               lambda b, c, hb: (b, c, hb, 0)),
        scratch_shapes=[
            pltpu.VMEM((ry * hblk, rx * W), cdt),   # per-channel staging
            pltpu.VMEM((ry * hblk, Wrx), cdt),      # column-interleaved intermediate
        ],
        compiler_params=pltpu.CompilerParams(
            dimension_semantics=("parallel", "parallel", "parallel"),
            vmem_limit_bytes=vmem_limit),
        cost_estimate=pl.CostEstimate(flops=int(flops), transcendentals=0,
                                      bytes_accessed=int(bytes_accessed)),
    )(x, q, p)


def pixel_shuffle_reference(x, ry=2, rx=2):
    """Pure-JAX reference (mirrors the PyTorch reshape/permute/reshape)."""
    B, C, H, W = x.shape
    c_out = C // (ry * rx)
    y = x.reshape(B, c_out, ry, rx, H, W)
    y = y.transpose(0, 1, 4, 2, 5, 3)
    return y.reshape(B, c_out, H * ry, W * rx)


if __name__ == "__main__":
    key = jax.random.PRNGKey(0)
    B, C, H, W = 2, 4, 16, 16
    ry = rx = 2                       # module defaults

    x = jax.random.normal(key, (B, C, H, W), dtype=jnp.float32)

    out = pixel_shuffle(x, ry=ry, rx=rx)
    out = jax.block_until_ready(out)
    assert out.shape == (B, C // (ry * rx), H * ry, W * rx), out.shape

    ref = pixel_shuffle_reference(x, ry=ry, rx=rx)
    np.testing.assert_allclose(np.asarray(out), np.asarray(ref),
                               rtol=1e-6, atol=1e-6)
    print("KERNEL_OK")
</pallas_src>

<mosaic_0001>
module attributes {stable_mosaic.version = 11 : i64} {
  func.func @_pixel_shuffle_kernel(%arg0: i32, %arg1: i32, %arg2: i32, %arg3: memref<1x4x16x16xf32, #tpu.memory_space<vmem>>, %arg4: memref<32x32xf32, #tpu.memory_space<vmem>>, %arg5: memref<32x32xf32, #tpu.memory_space<vmem>>, %arg6: memref<1x1x32x32xf32, #tpu.memory_space<vmem>>, %arg7: memref<32x32xf32, #tpu.memory_space<vmem>>, %arg8: memref<32x32xf32, #tpu.memory_space<vmem>>) attributes {dimension_semantics = [#tpu.dimension_semantics<parallel>, #tpu.dimension_semantics<parallel>, #tpu.dimension_semantics<parallel>], iteration_bounds = array<i64: 2, 1, 1>, scalar_prefetch = 0 : i64, scratch_operands = 2 : i64, tpu.core_type = #tpu.core_type<tc>, window_params = [{transform_indices = @transform_0, window_bounds = array<i64: 1, 4, 16, 16>}, {pipeline_mode = #tpu.pipeline_mode<synchronous>, transform_indices = @transform_1, window_bounds = array<i64: 32, 32>}, {pipeline_mode = #tpu.pipeline_mode<synchronous>, transform_indices = @transform_2, window_bounds = array<i64: 32, 32>}, {transform_indices = @transform_3, window_bounds = array<i64: 1, 1, 32, 32>}]} {
    %c0 = arith.constant 0 : index
    %c0_0 = arith.constant 0 : index
    %c0_1 = arith.constant 0 : index
    %c0_2 = arith.constant 0 : index
    %0 = vector.load %arg3[%c0, %c0_0, %c0_1, %c0_2] : memref<1x4x16x16xf32, #tpu.memory_space<vmem>>, vector<1x1x16x16xf32>
    %1 = vector.shape_cast %0 : vector<1x1x16x16xf32> to vector<16x16xf32>
    %c0_3 = arith.constant 0 : index
    %c0_4 = arith.constant 0 : index
    %2 = vector.load %arg7[%c0_3, %c0_4] : memref<32x32xf32, #tpu.memory_space<vmem>>, vector<16x16xf32>
    tpu.vector_store %arg7[%c0_3, %c0_4], %1 {strides = array<i32>} : memref<32x32xf32, #tpu.memory_space<vmem>>, vector<16x16xf32>,
    %c0_5 = arith.constant 0 : index
    %c1 = arith.constant 1 : index
    %c0_6 = arith.constant 0 : index
    %c0_7 = arith.constant 0 : index
    %3 = vector.load %arg3[%c0_5, %c1, %c0_6, %c0_7] : memref<1x4x16x16xf32, #tpu.memory_space<vmem>>, vector<1x1x16x16xf32>
    %4 = vector.shape_cast %3 : vector<1x1x16x16xf32> to vector<16x16xf32>
    %c0_8 = arith.constant 0 : index
    %c16 = arith.constant 16 : index
    %5 = vector.load %arg7[%c0_8, %c16] : memref<32x32xf32, #tpu.memory_space<vmem>>, vector<16x16xf32>
    tpu.vector_store %arg7[%c0_8, %c16], %4 {strides = array<i32>} : memref<32x32xf32, #tpu.memory_space<vmem>>, vector<16x16xf32>,
    %c0_9 = arith.constant 0 : index
    %c2 = arith.constant 2 : index
    %c0_10 = arith.constant 0 : index
    %c0_11 = arith.constant 0 : index
    %6 = vector.load %arg3[%c0_9, %c2, %c0_10, %c0_11] : memref<1x4x16x16xf32, #tpu.memory_space<vmem>>, vector<1x1x16x16xf32>
    %7 = vector.shape_cast %6 : vector<1x1x16x16xf32> to vector<16x16xf32>
    %c16_12 = arith.constant 16 : index
    %c0_13 = arith.constant 0 : index
    %8 = vector.load %arg7[%c16_12, %c0_13] : memref<32x32xf32, #tpu.memory_space<vmem>>, vector<16x16xf32>
    tpu.vector_store %arg7[%c16_12, %c0_13], %7 {strides = array<i32>} : memref<32x32xf32, #tpu.memory_space<vmem>>, vector<16x16xf32>,
    %c0_14 = arith.constant 0 : index
    %c3 = arith.constant 3 : index
    %c0_15 = arith.constant 0 : index
    %c0_16 = arith.constant 0 : index
    %9 = vector.load %arg3[%c0_14, %c3, %c0_15, %c0_16] : memref<1x4x16x16xf32, #tpu.memory_space<vmem>>, vector<1x1x16x16xf32>
    %10 = vector.shape_cast %9 : vector<1x1x16x16xf32> to vector<16x16xf32>
    %c16_17 = arith.constant 16 : index
    %c16_18 = arith.constant 16 : index
    %11 = vector.load %arg7[%c16_17, %c16_18] : memref<32x32xf32, #tpu.memory_space<vmem>>, vector<16x16xf32>
    tpu.vector_store %arg7[%c16_17, %c16_18], %10 {strides = array<i32>} : memref<32x32xf32, #tpu.memory_space<vmem>>, vector<16x16xf32>,
    %c0_19 = arith.constant 0 : index
    %c0_20 = arith.constant 0 : index
    %12 = vector.load %arg7[%c0_19, %c0_20] : memref<32x32xf32, #tpu.memory_space<vmem>>, vector<32x32xf32>
    %c0_21 = arith.constant 0 : index
    %c0_22 = arith.constant 0 : index
    %13 = vector.load %arg5[%c0_21, %c0_22] : memref<32x32xf32, #tpu.memory_space<vmem>>, vector<32x32xf32>
    %cst = arith.constant dense<0.000000e+00> : vector<32x32xf32>
    %14 = tpu.matmul %12, %13, %cst {dimension_numbers = #tpu.dot_dimension_numbers<[1], [0], [0], [1], [0, 0, 1, 1], [], []>} : vector<32x32xf32>, vector<32x32xf32>, vector<32x32xf32> -> vector<32x32xf32>
    %c0_23 = arith.constant 0 : index
    %c0_24 = arith.constant 0 : index
    %15 = vector.load %arg8[%c0_23, %c0_24] : memref<32x32xf32, #tpu.memory_space<vmem>>, vector<32x32xf32>
    tpu.vector_store %arg8[%c0_23, %c0_24], %14 {strides = array<i32>} : memref<32x32xf32, #tpu.memory_space<vmem>>, vector<32x32xf32>,
    %c0_25 = arith.constant 0 : index
    %c0_26 = arith.constant 0 : index
    %16 = vector.load %arg4[%c0_25, %c0_26] : memref<32x32xf32, #tpu.memory_space<vmem>>, vector<32x32xf32>
    %c0_27 = arith.constant 0 : index
    %c0_28 = arith.constant 0 : index
    %17 = vector.load %arg8[%c0_27, %c0_28] : memref<32x32xf32, #tpu.memory_space<vmem>>, vector<32x32xf32>
    %cst_29 = arith.constant dense<0.000000e+00> : vector<32x32xf32>
    %18 = tpu.matmul %16, %17, %cst_29 {dimension_numbers = #tpu.dot_dimension_numbers<[1], [0], [0], [1], [0, 0, 1, 1], [], []>} : vector<32x32xf32>, vector<32x32xf32>, vector<32x32xf32> -> vector<32x32xf32>
    %c0_30 = arith.constant 0 : index
    %c0_31 = arith.constant 0 : index
    %c0_32 = arith.constant 0 : index
    %c0_33 = arith.constant 0 : index
    %19 = vector.load %arg6[%c0_30, %c0_31, %c0_32, %c0_33] : memref<1x1x32x32xf32, #tpu.memory_space<vmem>>, vector<1x1x32x32xf32>
    %20 = vector.shape_cast %19 : vector<1x1x32x32xf32> to vector<32x32xf32>
    %21 = vector.shape_cast %18 : vector<32x32xf32> to vector<1x1x32x32xf32>
    tpu.vector_store %arg6[%c0_30, %c0_31, %c0_32, %c0_33], %21 {strides = array<i32>} : memref<1x1x32x32xf32, #tpu.memory_space<vmem>>, vector<1x1x32x32xf32>,
    return
  }
  func.func @transform_0(%arg0: i32, %arg1: i32, %arg2: i32) -> (i32, i32, i32, i32) {
    %c0_i32 = arith.constant 0 : i32
    %c0_i32_0 = arith.constant 0 : i32
    return %arg0, %arg1, %arg2, %c0_i32 : i32, i32, i32, i32
  }
  func.func @transform_1(%arg0: i32, %arg1: i32, %arg2: i32) -> (i32, i32) {
    %c0_i32 = arith.constant 0 : i32
    %c0_i32_0 = arith.constant 0 : i32
    %c0_i32_1 = arith.constant 0 : i32
    return %c0_i32, %c0_i32_0 : i32, i32
  }
  func.func @transform_2(%arg0: i32, %arg1: i32, %arg2: i32) -> (i32, i32) {
    %c0_i32 = arith.constant 0 : i32
    %c0_i32_0 = arith.constant 0 : i32
    %c0_i32_1 = arith.constant 0 : i32
    return %c0_i32, %c0_i32_0 : i32, i32
  }
  func.func @transform_3(%arg0: i32, %arg1: i32, %arg2: i32) -> (i32, i32, i32, i32) {
    %c0_i32 = arith.constant 0 : i32
    %c0_i32_0 = arith.constant 0 : i32
    return %arg0, %arg1, %arg2, %c0_i32 : i32, i32, i32, i32
  }
}

</mosaic_0001>

<llo_original>
// kernel: tpu_custom_call.1
$region0: #{tpu_custom_call.1}
  #allocation0 [shape = 'u32[]', space=smem, size = 0x4, offset = 0x4, fixed_abs, tag = 'smem constant byte address 0x4 - core index']
  #allocation1 [shape = 'u32[144,128]{1,0:T(1,128)}', space=vmem, size = 0x12000, scoped, tag = 'internal scratch']
  #allocation2 [shape = 'f32[32,32]{1,0:T(8,128)}', space=vmem, size = 0x4000, scoped, tag = 'scratch operand']
  #allocation3 [shape = 'f32[32,32]{1,0:T(8,128)}', space=vmem, size = 0x4000, scoped, tag = 'scratch operand']
  %s0 = inlined_call_operand.hbm [shape: f32[2,4,16,16], index: 0, kind: input, shape index: {}]
  %s1 = inlined_call_operand.hbm [shape: f32[32,32], index: 1, kind: input, shape index: {}]
  %s2 = inlined_call_operand.hbm [shape: f32[32,32], index: 2, kind: input, shape index: {}]
  %s3 = inlined_call_operand.hbm [shape: f32[2,1,32,32], index: 3, kind: output, shape index: {}]
  %s4 = sld [smem:[#allocation0]]
  $region57: #{tpu_custom_call.1} parent=0
    _
  %s6 = ssub.s32 1, %s4
  %s7 = scalar_select 0, %s6, %s4
  $region1: #{tpu_custom_call.1} parent=0
    #allocation4 [shape = 'u8[65536]{0}', space=vmem, size = 0x10000, scoped, tag = 'input window, operand 0']
    #allocation5 [shape = 's32[2]{0}', space=sflag, size = 0x8, scoped, tag = 'scoped memory for tpu_custom_call.1']
    #allocation6 [shape = 's32[2]{0}', space=sflag, size = 0x8, scoped, tag = 'scoped memory for tpu_custom_call.1']
    #allocation7 [shape = 'u8[16384]{0}', space=vmem, size = 0x4000, scoped, tag = 'input window, operand 1, single buffered']
    #allocation8 [shape = 's32[1]{0}', space=sflag, size = 0x4, scoped, tag = 'scoped memory for tpu_custom_call.1']
    #allocation9 [shape = 'u8[16384]{0}', space=vmem, size = 0x4000, scoped, tag = 'input window, operand 2, single buffered']
    #allocation10 [shape = 'u8[32768]{0}', space=vmem, size = 0x8000, scoped, tag = 'output window, operand 0']
    %8 = vsyncpa [#allocation5], 0
    %s9 = scalar_lea.sflag [#allocation5], 1
    %10 = vsyncpa %s9, 0
    %11 = vsyncpa [#allocation8], 0
    %12 = vsyncpa [#allocation6], 0
    %s13 = scalar_lea.sflag [#allocation6], 1
    %14 = vsyncpa %s13, 0
    loop: start=0, step=1, limit=4
    $region2: #{tpu_custom_call.1} parent=1 // loop_pre_header
      _
    $region3: #{tpu_custom_call.1} parent=1 // loop_header
      %s16 = sphi 0, %s20
      %p17 = scmp.ge.s32.totalorder %s16, 4
      %s23 = sphi 0, %s42
      %s24 = sphi 0, %s38
      %s25 = sphi 0, %s34
      %s26 = sphi 0, %s23
      %s27 = sphi 0, %s24
      %s28 = sphi 0, %s25
      %s29 = sphi 0, %s26
      %s30 = sphi 0, %s27
      %s31 = sphi 0, %s28
      %s49 = sphi 0, %s51
      %s52 = sphi 0, %s49
      %s53 = sphi 0, %s52
      %s69 = sphi 0, %s53
      %s73 = sphi 0, %s73
      %s75 = sphi 0, %s73
      %s76 = sphi 0, %s75
      %s90 = sphi 0, %s76
      %s94 = sphi 0, %s94
      %s96 = sphi 0, %s94
      %s97 = sphi 0, %s96
      %s111 = sphi 0, %s97
      %s121 = sphi 0, %s123
      %s124 = sphi 0, %s121
      %s125 = sphi 0, %s124
      %s141 = sphi 0, %s125
    $region4: #{tpu_custom_call.1} parent=1 // loop_header_branch
      %19 = sbr.rel (%p17) target = $region8
    $region5: #{tpu_custom_call.1} parent=1 // loop_body
      %s21 = ssub.s32 %s16, 1
      %s22 = ssub.s32 %s16, 2
      %s32 = sadd.s32 1, %s25
      %p33 = scmp.ge.s32.totalorder %s32, 1
      %s34 = scalar_select %p33, 0, %s32
      %s35 = sadd.s32 1, %s24
      %s36 = scalar_select %p33, %s35, %s24
      %p37 = scmp.ge.s32.totalorder %s36, 1
      %s38 = scalar_select %p37, 0, %s36
      %s39 = sadd.s32 1, %s23
      %s40 = scalar_select %p37, %s39, %s23
      %p41 = scmp.ge.s32.totalorder %s40, 2
      %s42 = scalar_select %p41, 0, %s40
      %s43 = ssub.s32 %s23, %s42
      %s44 = ssub.s32 %s24, %s38
      %s45 = sor.u32 %s43, %s44
      %s46 = ssub.s32 %s25, %s34
      %s47 = sor.u32 %s45, %s46
      %p48 = scmp.eq.s32.totalorder %s47, 0
      %s50 = sadd.s32 %s49, 1
      %s51 = scalar_select %p48, %s49, %s50
      %p54 = pneg %p48
      %p55 = scmp.eq.s32.totalorder %s16, 1
      %p56 = por %p54, %p55
      %p57 = scmp.ne.s32.totalorder %s49, %s52
      %p58 = scmp.eq.s32.totalorder %s16, 0
      %p59 = por %p57, %p58
      %p60 = scmp.ne.s32.totalorder %s49, %s52
      %p61 = scmp.eq.s32.totalorder %s21, 1
      %p62 = por %p60, %p61
      %p63 = scmp.ne.s32.totalorder %s52, %s53
      %p64 = scmp.eq.s32.totalorder %s21, 0
      %p65 = por %p63, %p64
      %p66 = scmp.ne.s32.totalorder %s52, %s53
      %p67 = scmp.eq.s32.totalorder %s22, 1
      %p68 = por %p66, %p67
      %p70 = scmp.ne.s32.totalorder %s53, %s69
      %p71 = scmp.eq.s32.totalorder %s22, 0
      %p72 = por %p70, %p71
      %s74 = sadd.s32 %s73, 1
      %p77 = scmp.eq.s32.totalorder %s16, 1
      %p78 = scmp.ne.s32.totalorder %s73, %s75
      %p79 = scmp.eq.s32.totalorder %s16, 0
      %p80 = por %p78, %p79
      %p81 = scmp.ne.s32.totalorder %s73, %s75
      %p82 = scmp.eq.s32.totalorder %s21, 1
      %p83 = por %p81, %p82
      %p84 = scmp.ne.s32.totalorder %s75, %s76
      %p85 = scmp.eq.s32.totalorder %s21, 0
      %p86 = por %p84, %p85
      %p87 = scmp.ne.s32.totalorder %s75, %s76
      %p88 = scmp.eq.s32.totalorder %s22, 1
      %p89 = por %p87, %p88
      %p91 = scmp.ne.s32.totalorder %s76, %s90
      %p92 = scmp.eq.s32.totalorder %s22, 0
      %p93 = por %p91, %p92
      %s95 = sadd.s32 %s94, 1
      %p98 = scmp.eq.s32.totalorder %s16, 1
      %p99 = scmp.ne.s32.totalorder %s94, %s96
      %p100 = scmp.eq.s32.totalorder %s16, 0
      %p101 = por %p99, %p100
      %p102 = scmp.ne.s32.totalorder %s94, %s96
      %p103 = scmp.eq.s32.totalorder %s21, 1
      %p104 = por %p102, %p103
      %p105 = scmp.ne.s32.totalorder %s96, %s97
      %p106 = scmp.eq.s32.totalorder %s21, 0
      %p107 = por %p105, %p106
      %p108 = scmp.ne.s32.totalorder %s96, %s97
      %p109 = scmp.eq.s32.totalorder %s22, 1
      %p110 = por %p108, %p109
      %p112 = scmp.ne.s32.totalorder %s97, %s111
      %p113 = scmp.eq.s32.totalorder %s22, 0
      %p114 = por %p112, %p113
      %s115 = ssub.s32 %s23, %s42
      %s116 = ssub.s32 %s24, %s38
      %s117 = sor.u32 %s115, %s116
      %s118 = ssub.s32 %s25, %s34
      %s119 = sor.u32 %s117, %s118
      %p120 = scmp.eq.s32.totalorder %s119, 0
      %s122 = sadd.s32 %s121, 1
      %s123 = scalar_select %p120, %s121, %s122
      %p126 = pneg %p120
      %p127 = scmp.eq.s32.totalorder %s16, 1
      %p128 = por %p126, %p127
      %p129 = scmp.ne.s32.totalorder %s121, %s124
      %p130 = scmp.eq.s32.totalorder %s16, 0
      %p131 = por %p129, %p130
      %p132 = scmp.ne.s32.totalorder %s121, %s124
      %p133 = scmp.eq.s32.totalorder %s21, 1
      %p134 = por %p132, %p133
      %p135 = scmp.ne.s32.totalorder %s124, %s125
      %p136 = scmp.eq.s32.totalorder %s21, 0
      %p137 = por %p135, %p136
      %p138 = scmp.ne.s32.totalorder %s124, %s125
      %p139 = scmp.eq.s32.totalorder %s22, 1
      %p140 = por %p138, %p139
      %p142 = scmp.ne.s32.totalorder %s125, %s141
      %p143 = scmp.eq.s32.totalorder %s22, 0
      %p144 = por %p142, %p143
      %p145 = scmp.le.s32.totalorder 1, %s16
      %p146 = scmp.lt.s32.totalorder %s16, 3
      %p147 = pnand %p145, %p146
      %p148 = pneg %p147
      // Predicated region
      $region9: #{tpu_custom_call.1} parent=5 // pred_check
        _
      $region10: #{tpu_custom_call.1} parent=5 // pred_check_branch
        %150 = sbr.rel (%p147) target = $region12
      $region11: #{tpu_custom_call.1} parent=5 // pred_region
        %s151 = ssub.s32 %s16, 1
        // Predicated region
        $region13: #{tpu_custom_call.1} parent=11 // pred_check
          %p152 = pneg %p86
        $region14: #{tpu_custom_call.1} parent=11 // pred_check_branch
          %154 = sbr.rel (%p152) target = $region16
        $region15: #{tpu_custom_call.1} parent=11 // pred_region
          %s156 = ssub.s32 512, 512
          %157 = vsyncadd [#allocation8], %s156
          %s158 = sshll.u32 [#allocation7], 4
          %s159 = int_to_ptr.vmem [resolvable:$true] %s158
          %164 = dma.hbm_to_vmem [thread:$0]  %s1, 512, %s159, [#allocation8], 128, 128, 8
        $region16: #{tpu_custom_call.1} parent=11 // pred_fallthru
          _
        // Predicated region
        $region17: #{tpu_custom_call.1} parent=11 // pred_check
          %p165 = pneg %p107
        $region18: #{tpu_custom_call.1} parent=11 // pred_check_branch
          %167 = sbr.rel (%p165) target = $region20
        $region19: #{tpu_custom_call.1} parent=11 // pred_region
          %s169 = ssub.s32 512, 512
          %170 = vsyncadd [#allocation8], %s169
          %s171 = sshll.u32 [#allocation9], 4
          %s172 = int_to_ptr.vmem [resolvable:$true] %s171
          %177 = dma.hbm_to_vmem [thread:$0]  %s2, 512, %s172, [#allocation8], 128, 128, 8
        $region20: #{tpu_custom_call.1} parent=11 // pred_fallthru
          _
      $region12: #{tpu_custom_call.1} parent=5 // pred_fallthru
        _
      %p178 = scmp.lt.s32.totalorder %s16, 2
      // Predicated region
      $region21: #{tpu_custom_call.1} parent=5 // pred_check
        %p179 = pneg %p178
      $region22: #{tpu_custom_call.1} parent=5 // pred_check_branch
        %181 = sbr.rel (%p179) target = $region24
      $region23: #{tpu_custom_call.1} parent=5 // pred_region
        // Predicated region
        $region25: #{tpu_custom_call.1} parent=23 // pred_check
          %p182 = pneg %p59
        $region26: #{tpu_custom_call.1} parent=23 // pred_check_branch
          %184 = sbr.rel (%p182) target = $region28
        $region27: #{tpu_custom_call.1} parent=23 // pred_region
          %s185 = sand.u32 %s49, 1
          %s186 = scalar_lea.sflag [#allocation5], %s185
          %s187 = sand.u32 %s49, 1
          %s188 = smul.addr %s187, 64
          %s189 = scalar_lea.vmem [#allocation4], %s188
          %s190 = smul.u32 4, %s24
          %s191 = smul.u32 2, %s25
          %s193 = ssub.s32 1024, 1024
          %194 = vsyncadd %s186, %s193
          %s195 = smul.addr %s190, 2
          %s196 = sadd.s32 %s191, %s195
          %s197 = smul.addr %s23, 8
          %s198 = sadd.s32 %s196, %s197
          %s199 = smul.addr %s198, 128
          %s200 = scalar_lea.hbm %s0, %s199
          %s201 = sshll.u32 %s189, 4
          %s202 = int_to_ptr.vmem [resolvable:$true] %s201
          %207 = dma.hbm_to_vmem [thread:$0]  %s200, 1024, %s202, %s186, 128, 128, 8
        $region28: #{tpu_custom_call.1} parent=23 // pred_fallthru
          _
      $region24: #{tpu_custom_call.1} parent=5 // pred_fallthru
        _
      %p208 = scmp.le.s32.totalorder 1, %s16
      %p209 = scmp.lt.s32.totalorder %s16, 3
      %p210 = pnand %p208, %p209
      %p211 = pneg %p210
      // Predicated region
      $region29: #{tpu_custom_call.1} parent=5 // pred_check
        _
      $region30: #{tpu_custom_call.1} parent=5 // pred_check_branch
        %213 = sbr.rel (%p210) target = $region32
      $region31: #{tpu_custom_call.1} parent=5 // pred_region
        %s214 = ssub.s32 %s16, 1
        %s215 = sand.u32 %s52, 1
        %s216 = scalar_lea.sflag [#allocation5], %s215
        %s217 = sand.u32 %s52, 1
        %s218 = smul.addr %s217, 64
        %s219 = scalar_lea.vmem [#allocation4], %s218
        // Predicated region
        $region33: #{tpu_custom_call.1} parent=31 // pred_check
          %p220 = pneg %p65
        $region34: #{tpu_custom_call.1} parent=31 // pred_check_branch
          %222 = sbr.rel (%p220) target = $region36
        $region35: #{tpu_custom_call.1} parent=31 // pred_region
          %223 = dma.done %s216, 1024
        $region36: #{tpu_custom_call.1} parent=31 // pred_fallthru
          _
        // Predicated region
        $region37: #{tpu_custom_call.1} parent=31 // pred_check
          %p224 = pneg %p86
        $region38: #{tpu_custom_call.1} parent=31 // pred_check_branch
          %226 = sbr.rel (%p224) target = $region40
        $region39: #{tpu_custom_call.1} parent=31 // pred_region
          %227 = dma.done [#allocation8], 512
        $region40: #{tpu_custom_call.1} parent=31 // pred_fallthru
          _
        // Predicated region
        $region41: #{tpu_custom_call.1} parent=31 // pred_check
          %p228 = pneg %p107
        $region42: #{tpu_custom_call.1} parent=31 // pred_check_branch
          %230 = sbr.rel (%p228) target = $region44
        $region43: #{tpu_custom_call.1} parent=31 // pred_region
          %231 = dma.done [#allocation8], 512
        $region44: #{tpu_custom_call.1} parent=31 // pred_fallthru
          _
        %s232 = sand.u32 %s52, 1
        %s233 = scalar_lea.sflag [#allocation5], %s232
        %s234 = sand.u32 %s52, 1
        %s235 = smul.addr %s234, 64
        %s236 = scalar_lea.vmem [#allocation4], %s235
        %p237 = pneg %p65
        %p238 = pneg %p62
        %p239 = pneg %p86
        %p240 = pneg %p83
        %p241 = pneg %p107
        %p242 = pneg %p104
        %p243 = pneg %p137
        %p244 = pneg %p134
        %s245 = sand.u32 %s124, 1
        %s246 = scalar_lea.sflag [#allocation6], %s245
        %s247 = sand.u32 %s124, 1
        %s248 = smul.addr %s247, 32
        %s249 = scalar_lea.vmem [#allocation10], %s248
        %s250 = smul.u32 4, %s27
        %s251 = smul.u32 2, %s28
        %s252 = smul.u32 4, %s28
        %v253 = vld [vmem:[%s219] sm:$0xff]
        %v254 = vld [vmem:[%s219 + $0x8] sm:$0xff]
        %vm255 = vcmask 130048
        %256 = vst.msk [vmem:[#allocation2] sm:$0xff] %vm255, %v253
        %257 = vst.msk [vmem:[#allocation2 + $0x8] sm:$0xff] %vm255, %v254
        %s258 = scalar_lea.vmem %s219, 16 [#allocation4]
        %v259 = vld [vmem:[%s258] sm:$0xff]
        %v260 = vld [vmem:[%s258 + $0x8] sm:$0xff]
        %263 = vrot.lane.b32.xlu0 %v259, 16
        %v264 = vpop.permute.xlu0 %263
        %265 = vrot.lane.b32.xlu0 %v260, 16
        %v266 = vpop.permute.xlu0 %265
        %vm269 = vcmask 261248
        %270 = vst.msk [vmem:[#allocation2] sm:$0xff] %vm269, %v264
        %271 = vst.msk [vmem:[#allocation2 + $0x8] sm:$0xff] %vm269, %v266
        %s272 = scalar_lea.vmem %s219, 32 [#allocation4]
        %v273 = vld [vmem:[%s272] sm:$0xff]
        %v274 = vld [vmem:[%s272 + $0x8] sm:$0xff]
        %275 = vst.msk [vmem:[#allocation2 + $0x10] sm:$0xff] %vm255, %v273
        %276 = vst.msk [vmem:[#allocation2 + $0x18] sm:$0xff] %vm255, %v274
        %s277 = scalar_lea.vmem %s219, 48 [#allocation4]
        %v278 = vld [vmem:[%s277] sm:$0xff]
        %v279 = vld [vmem:[%s277 + $0x8] sm:$0xff]
        %282 = vrot.lane.b32.xlu0 %v278, 16
        %v283 = vpop.permute.xlu0 %282
        %284 = vrot.lane.b32.xlu0 %v279, 16
        %v285 = vpop.permute.xlu0 %284
        %288 = vst.msk [vmem:[#allocation2 + $0x10] sm:$0xff] %vm269, %v283
        %289 = vst.msk [vmem:[#allocation2 + $0x18] sm:$0xff] %vm269, %v285
        %v290 = vld [vmem:[#allocation2] sm:$0xff]
        %v291 = vld [vmem:[#allocation2 + $0x8] sm:$0xff]
        %v292 = vld [vmem:[#allocation2 + $0x10] sm:$0xff]
        %v293 = vld [vmem:[#allocation2 + $0x18] sm:$0xff]
        %v294 = vld [vmem:[#allocation9] sm:$0xff]
        %v295 = vld [vmem:[#allocation9 + $0x8] sm:$0xff]
        %v296 = vld [vmem:[#allocation9 + $0x10] sm:$0xff]
        %v297 = vld [vmem:[#allocation9 + $0x18] sm:$0xff]
        %vm298 = vcmask 261120
        %v300 = vsel %vm298, %v290, 0
        %v303 = vsel %vm298, %v291, 0
        %v306 = vsel %vm298, %v292, 0
        %v309 = vsel %vm298, %v293, 0
        %311 = vmatprep.subr.mxu0 0.0
        %312 = vmatpush1.msra.mxu0 0.0
        %313 = vmatprep.subr.mxu0 0.0
        %314 = vmatpush1.msra.mxu0 0.0
        %315 = vmatprep.subr.mxu0 0.0
        %316 = vmatpush1.msra.mxu0 0.0
        %317 = vmatprep.subr.mxu0 0.0
        %318 = vmatpush1.msra.mxu0 0.0
        %319 = vmatprep.subr.mxu0 0.0
        %320 = vmatpush1.msra.mxu0 0.0
        %321 = vmatprep.subr.mxu0 0.0
        %322 = vmatpush1.msra.mxu0 0.0
        %323 = vmatprep.subr.mxu0 0.0
        %324 = vmatpush1.msra.mxu0 0.0
        %325 = vmatprep.subr.mxu0 0.0
        %326 = vmatpush1.msra.mxu0 0.0
        %327 = vmatprep.subr.mxu0 0.0
        %328 = vmatpush1.msra.mxu0 0.0
        %329 = vmatprep.subr.mxu0 0.0
        %330 = vmatpush1.msra.mxu0 0.0
        %331 = vmatprep.subr.mxu0 0.0
        %332 = vmatpush1.msra.mxu0 0.0
        %333 = vmatprep.subr.mxu0 0.0
        %334 = vmatpush1.msra.mxu0 0.0
        %335 = vmatprep.subr.mxu0 0.0
        %336 = vmatpush1.msra.mxu0 %v297
        %337 = vmatprep.subr.mxu0 0.0
        %338 = vmatpush1.msra.mxu0 %v296
        %339 = vmatprep.subr.mxu0 0.0
        %340 = vmatpush1.msra.mxu0 %v295
        %341 = vmatprep.subr.mxu0 0.0
        %342 = vmatpush1.msra.mxu0 %v294
        %343 = vmatprep.subr.mxu0 0.0
        %344 = vmatpush2.msra.mxu0 0.0
        %345 = vmatprep.subr.mxu0 0.0
        %346 = vmatpush2.msra.mxu0 0.0
        %347 = vmatprep.subr.mxu0 0.0
        %348 = vmatpush2.msra.mxu0 0.0
        %349 = vmatprep.subr.mxu0 0.0
        %350 = vmatpush2.msra.mxu0 0.0
        %351 = vmatprep.subr.mxu0 0.0
        %352 = vmatpush2.msra.mxu0 0.0
        %353 = vmatprep.subr.mxu0 0.0
        %354 = vmatpush2.msra.mxu0 0.0
        %355 = vmatprep.subr.mxu0 0.0
        %356 = vmatpush2.msra.mxu0 0.0
        %357 = vmatprep.subr.mxu0 0.0
        %358 = vmatpush2.msra.mxu0 0.0
        %359 = vmatprep.subr.mxu0 0.0
        %360 = vmatpush2.msra.mxu0 0.0
        %361 = vmatprep.subr.mxu0 0.0
        %362 = vmatpush2.msra.mxu0 0.0
        %363 = vmatprep.subr.mxu0 0.0
        %364 = vmatpush2.msra.mxu0 0.0
        %365 = vmatprep.subr.mxu0 0.0
        %366 = vmatpush2.msra.mxu0 0.0
        %367 = vmatprep.subr.mxu0 0.0
        %368 = vmatpush2.msra.mxu0 0.0
        %369 = vmatprep.subr.mxu0 0.0
        %370 = vmatpush2.msra.mxu0 0.0
        %371 = vmatprep.subr.mxu0 0.0
        %372 = vmatpush2.msra.mxu0 0.0
        %373 = vmatprep.subr.mxu0 0.0
        %374 = vmatpush2.msra.mxu0 0.0
        %375 = vmatprep.mubr.f32.mxu0 0.0
        %376 = vmatmul.mubr.f32.gmra.mxu0 %v300
        %v377 = vpop.f32.mrf.mxu0
        %v378 = vadd.f32 0.0, %v377
        %v379 = vpop.f32.mrf.mxu0
        %380 = vmatprep.mubr.f32.mxu0 0.0
        %381 = vmatmul.mubr.f32.gmra.mxu0 %v303
        %v382 = vpop.f32.mrf.mxu0
        %v383 = vadd.f32 0.0, %v382
        %v384 = vpop.f32.mrf.mxu0
        %385 = vmatprep.mubr.f32.mxu0 0.0
        %386 = vmatmul.mubr.f32.gmra.mxu0 %v306
        %v387 = vpop.f32.mrf.mxu0
        %v388 = vadd.f32 0.0, %v387
        %v389 = vpop.f32.mrf.mxu0
        %390 = vmatprep.mubr.f32.mxu0 0.0
        %391 = vmatmul.mubr.f32.gmra.mxu0 %v309
        %v392 = vpop.f32.mrf.mxu0
        %v393 = vadd.f32 0.0, %v392
        %v394 = vpop.f32.mrf.mxu0
        %395 = vdwg.mxu0
        %396 = vst.msk [vmem:[#allocation3] sm:$0xff] %vm298, %v378
        %397 = vst.msk [vmem:[#allocation3 + $0x8] sm:$0xff] %vm298, %v383
        %398 = vst.msk [vmem:[#allocation3 + $0x10] sm:$0xff] %vm298, %v388
        %399 = vst.msk [vmem:[#allocation3 + $0x18] sm:$0xff] %vm298, %v393
        %v400 = vld [vmem:[#allocation7] sm:$0xff]
        %v401 = vld [vmem:[#allocation7 + $0x8] sm:$0xff]
        %v402 = vld [vmem:[#allocation7 + $0x10] sm:$0xff]
        %v403 = vld [vmem:[#allocation7 + $0x18] sm:$0xff]
        %v404 = vld [vmem:[#allocation3] sm:$0xff]
        %v405 = vld [vmem:[#allocation3 + $0x8] sm:$0xff]
        %v406 = vld [vmem:[#allocation3 + $0x10] sm:$0xff]
        %v407 = vld [vmem:[#allocation3 + $0x18] sm:$0xff]
        %v409 = vsel %vm298, %v400, 0
        %v412 = vsel %vm298, %v401, 0
        %v415 = vsel %vm298, %v402, 0
        %v418 = vsel %vm298, %v403, 0
        %420 = vmatprep.subr.mxu0 0.0
        %421 = vmatpush1.msra.mxu0 0.0
        %422 = vmatprep.subr.mxu0 0.0
        %423 = vmatpush1.msra.mxu0 0.0
        %424 = vmatprep.subr.mxu0 0.0
        %425 = vmatpush1.msra.mxu0 0.0
        %426 = vmatprep.subr.mxu0 0.0
        %427 = vmatpush1.msra.mxu0 0.0
        %428 = vmatprep.subr.mxu0 0.0
        %429 = vmatpush1.msra.mxu0 0.0
        %430 = vmatprep.subr.mxu0 0.0
        %431 = vmatpush1.msra.mxu0 0.0
        %432 = vmatprep.subr.mxu0 0.0
        %433 = vmatpush1.msra.mxu0 0.0
        %434 = vmatprep.subr.mxu0 0.0
        %435 = vmatpush1.msra.mxu0 0.0
        %436 = vmatprep.subr.mxu0 0.0
        %437 = vmatpush1.msra.mxu0 0.0
        %438 = vmatprep.subr.mxu0 0.0
        %439 = vmatpush1.msra.mxu0 0.0
        %440 = vmatprep.subr.mxu0 0.0
        %441 = vmatpush1.msra.mxu0 0.0
        %442 = vmatprep.subr.mxu0 0.0
        %443 = vmatpush1.msra.mxu0 0.0
        %444 = vmatprep.subr.mxu0 0.0
        %445 = vmatpush1.msra.mxu0 %v407
        %446 = vmatprep.subr.mxu0 0.0
        %447 = vmatpush1.msra.mxu0 %v406
        %448 = vmatprep.subr.mxu0 0.0
        %449 = vmatpush1.msra.mxu0 %v405
        %450 = vmatprep.subr.mxu0 0.0
        %451 = vmatpush1.msra.mxu0 %v404
        %452 = vmatprep.subr.mxu0 0.0
        %453 = vmatpush2.msra.mxu0 0.0
        %454 = vmatprep.subr.mxu0 0.0
        %455 = vmatpush2.msra.mxu0 0.0
        %456 = vmatprep.subr.mxu0 0.0
        %457 = vmatpush2.msra.mxu0 0.0
        %458 = vmatprep.subr.mxu0 0.0
        %459 = vmatpush2.msra.mxu0 0.0
        %460 = vmatprep.subr.mxu0 0.0
        %461 = vmatpush2.msra.mxu0 0.0
        %462 = vmatprep.subr.mxu0 0.0
        %463 = vmatpush2.msra.mxu0 0.0
        %464 = vmatprep.subr.mxu0 0.0
        %465 = vmatpush2.msra.mxu0 0.0
        %466 = vmatprep.subr.mxu0 0.0
        %467 = vmatpush2.msra.mxu0 0.0
        %468 = vmatprep.subr.mxu0 0.0
        %469 = vmatpush2.msra.mxu0 0.0
        %470 = vmatprep.subr.mxu0 0.0
        %471 = vmatpush2.msra.mxu0 0.0
        %472 = vmatprep.subr.mxu0 0.0
        %473 = vmatpush2.msra.mxu0 0.0
        %474 = vmatprep.subr.mxu0 0.0
        %475 = vmatpush2.msra.mxu0 0.0
        %476 = vmatprep.subr.mxu0 0.0
        %477 = vmatpush2.msra.mxu0 0.0
        %478 = vmatprep.subr.mxu0 0.0
        %479 = vmatpush2.msra.mxu0 0.0
        %480 = vmatprep.subr.mxu0 0.0
        %481 = vmatpush2.msra.mxu0 0.0
        %482 = vmatprep.subr.mxu0 0.0
        %483 = vmatpush2.msra.mxu0 0.0
        %484 = vmatprep.mubr.f32.mxu0 0.0
        %485 = vmatmul.mubr.f32.gmra.mxu0 %v409
        %v486 = vpop.f32.mrf.mxu0
        %v487 = vadd.f32 0.0, %v486
        %v488 = vpop.f32.mrf.mxu0
        %489 = vmatprep.mubr.f32.mxu0 0.0
        %490 = vmatmul.mubr.f32.gmra.mxu0 %v412
        %v491 = vpop.f32.mrf.mxu0
        %v492 = vadd.f32 0.0, %v491
        %v493 = vpop.f32.mrf.mxu0
        %494 = vmatprep.mubr.f32.mxu0 0.0
        %495 = vmatmul.mubr.f32.gmra.mxu0 %v415
        %v496 = vpop.f32.mrf.mxu0
        %v497 = vadd.f32 0.0, %v496
        %v498 = vpop.f32.mrf.mxu0
        %499 = vmatprep.mubr.f32.mxu0 0.0
        %500 = vmatmul.mubr.f32.gmra.mxu0 %v418
        %v501 = vpop.f32.mrf.mxu0
        %v502 = vadd.f32 0.0, %v501
        %v503 = vpop.f32.mrf.mxu0
        %504 = vdwg.mxu0
        %505 = vst.msk [vmem:[%s249] sm:$0xff] %vm298, %v487
        %506 = vst.msk [vmem:[%s249 + $0x8] sm:$0xff] %vm298, %v492
        %507 = vst.msk [vmem:[%s249 + $0x10] sm:$0xff] %vm298, %v497
        %508 = vst.msk [vmem:[%s249 + $0x18] sm:$0xff] %vm298, %v502
        %s509 = sand.u32 %s124, 1
        %s510 = scalar_lea.sflag [#allocation6], %s509
        %s511 = sand.u32 %s124, 1
        %s512 = smul.addr %s511, 32
        %s513 = scalar_lea.vmem [#allocation10], %s512
        // Predicated region
        $region45: #{tpu_custom_call.1} parent=31 // pred_check
          %p514 = pneg %p134
        $region46: #{tpu_custom_call.1} parent=31 // pred_check_branch
          %516 = sbr.rel (%p514) target = $region48
        $region47: #{tpu_custom_call.1} parent=31 // pred_region
          %s517 = smul.u32 4, %s28
          %s519 = ssub.s32 512, 512
          %520 = vsyncadd %s510, %s519
          %s521 = smul.addr %s27, 4
          %s522 = sadd.s32 %s517, %s521
          %s523 = smul.addr %s26, 4
          %s524 = sadd.s32 %s522, %s523
          %s525 = smul.addr %s524, 128
          %s526 = scalar_lea.hbm %s3, %s525
          %s527 = sshll.u32 %s513, 4
          %s528 = int_to_ptr.vmem [resolvable:$true] %s527
          %533 = dma.vmem_to_hbm [thread:$0]  %s528, 512, %s526, %s510, 128, 128, 8
        $region48: #{tpu_custom_call.1} parent=31 // pred_fallthru
          _
      $region32: #{tpu_custom_call.1} parent=5 // pred_fallthru
        _
      %p534 = scmp.le.s32.totalorder 2, %s16
      // Predicated region
      $region49: #{tpu_custom_call.1} parent=5 // pred_check
        %p535 = pneg %p534
      $region50: #{tpu_custom_call.1} parent=5 // pred_check_branch
        %537 = sbr.rel (%p535) target = $region52
      $region51: #{tpu_custom_call.1} parent=5 // pred_region
        %s538 = ssub.s32 %s16, 2
        // Predicated region
        $region53: #{tpu_custom_call.1} parent=51 // pred_check
          %p539 = pneg %p140
        $region54: #{tpu_custom_call.1} parent=51 // pred_check_branch
          %541 = sbr.rel (%p539) target = $region56
        $region55: #{tpu_custom_call.1} parent=51 // pred_region
          %s542 = sand.u32 %s125, 1
          %s543 = scalar_lea.sflag [#allocation6], %s542
          %s544 = sand.u32 %s125, 1
          %s545 = smul.addr %s544, 32
          %s546 = scalar_lea.vmem [#allocation10], %s545
          %547 = dma.done %s543, 512
        $region56: #{tpu_custom_call.1} parent=51 // pred_fallthru
          _
      $region52: #{tpu_custom_call.1} parent=5 // pred_fallthru
        _
    $region6: #{tpu_custom_call.1} parent=1 // loop_footer
      %s20 = sadd.s32 1, %s16
    $region7: #{tpu_custom_call.1} parent=1 // loop_footer_branch
      %15 = sbr.rel target = $region3
    $region8: #{tpu_custom_call.1} parent=1 // loop_exit
      _
    %548 = vsyncpa [#allocation5], 1
    %s549 = scalar_lea.sflag [#allocation5], 1
    %550 = vsyncpa %s549, 1
    %551 = vsyncpa [#allocation8], 1
    %552 = vsyncpa [#allocation6], 1
    %s553 = scalar_lea.sflag [#allocation6], 1
    %554 = vsyncpa %s553, 1

</llo_original>
